<compile_context>
chip_gen: v5e
topology: v5e:2x2
jax: 0.10.0
libtpu: 0.0.40
codegen_flags: <defaults>
</compile_context>

<pallas_src>
import jax
import jax.numpy as jnp
from jax.experimental import pallas as pl
from jax.experimental.pallas import tpu as pltpu

_LANES = 128       # vreg lane width
_SUBLANES = 8      # vreg sublane count (f32)
_VMEM_LIMIT = 32 * 1024 * 1024   # safe on v5e / v6e / v7x


def _round_up(n, m):
    return ((n + m - 1) // m) * m


# ---------------------------------------------------------------------------
# Path A: output_dim == 1 (the module default) — VPU dot product, no MXU.
# ---------------------------------------------------------------------------
def _linear_n1_kernel(x_ref, w_ref, b_ref, o_ref):
    # x_ref: [tm, K] VMEM; w_ref: [1, K] VMEM; b_ref: [1] SMEM (scalar bias)
    # o_ref: [tm, 128] VMEM — lane-dense store; logical output lives in lane 0.
    x = x_ref[...]
    w = w_ref[...]                                             # [1, K] broadcast
    s = jnp.sum(x * w, axis=-1, keepdims=True) + b_ref[0]      # [tm, 1]
    # Broadcast across all 128 lanes so the store is a full unmasked `vst`;
    # the wrapper slices [:, :1] to recover the logical output.
    o_ref[...] = jnp.broadcast_to(s, o_ref.shape).astype(o_ref.dtype)


def _linear_n1(x, weight, bias):
    M, K = x.shape
    tm = _round_up(min(M, 256), _SUBLANES)
    m_pad = _round_up(M, tm)
    if m_pad != M:
        x = jnp.pad(x, ((0, m_pad - M), (0, 0)))

    cost = pl.CostEstimate(
        flops=2 * m_pad * K,
        transcendentals=0,
        bytes_accessed=4 * (m_pad * K + K + m_pad * _LANES),
    )
    out = pl.pallas_call(
        _linear_n1_kernel,
        out_shape=jax.ShapeDtypeStruct((m_pad, _LANES), x.dtype),
        grid=(m_pad // tm,),
        in_specs=[
            pl.BlockSpec((tm, K), lambda i: (i, 0)),
            pl.BlockSpec((1, K), lambda i: (0, 0)),
            # Scalar bias in SMEM: no padded VMEM tile, no extra DMA / vreg.
            pl.BlockSpec(memory_space=pltpu.MemorySpace.SMEM),
        ],
        out_specs=pl.BlockSpec((tm, _LANES), lambda i: (i, 0)),
        compiler_params=pltpu.CompilerParams(
            dimension_semantics=("parallel",),
            vmem_limit_bytes=_VMEM_LIMIT,
        ),
        cost_estimate=cost,
    )(x, weight, bias)
    return out[:M, :1]


# ---------------------------------------------------------------------------
# Path B: general tiled matmul (output_dim > 1) — MXU with f32 accumulation.
# ---------------------------------------------------------------------------
def _matmul_bias_kernel(x_ref, w_ref, b_ref, o_ref, acc_ref):
    # x_ref: [tm, tk]; w_ref: [tk, tn] (pre-transposed); b_ref: [1, tn]
    # o_ref: [tm, tn]; acc_ref: [tm, tn] f32 VMEM scratch.
    @pl.when(pl.program_id(2) == 0)
    def _():
        acc_ref[...] = jnp.zeros_like(acc_ref)

    acc_ref[...] += jnp.dot(
        x_ref[...], w_ref[...], preferred_element_type=jnp.float32
    )

    @pl.when(pl.program_id(2) == pl.num_programs(2) - 1)
    def _():
        o_ref[...] = (acc_ref[...] + b_ref[...]).astype(o_ref.dtype)


def _linear_general(x, weight, bias):
    M, K = x.shape
    N = weight.shape[0]

    # Transpose once in the wrapper (XLA) so the kernel never does `w.T`.
    wt = weight.T                                              # [K, N]

    tm = _round_up(min(M, 256), _SUBLANES)
    tn = _round_up(min(N, 256), _LANES)
    tk = _round_up(min(K, 512), _LANES)
    m_pad = _round_up(M, tm)
    n_pad = _round_up(N, tn)
    k_pad = _round_up(K, tk)

    if (m_pad, k_pad) != (M, K):
        x = jnp.pad(x, ((0, m_pad - M), (0, k_pad - K)))
    if (k_pad, n_pad) != (K, N):
        wt = jnp.pad(wt, ((0, k_pad - K), (0, n_pad - N)))
    b2 = bias.reshape(1, N)
    if n_pad != N:
        b2 = jnp.pad(b2, ((0, 0), (0, n_pad - N)))

    grid = (m_pad // tm, n_pad // tn, k_pad // tk)
    cost = pl.CostEstimate(
        flops=2 * m_pad * n_pad * k_pad,
        transcendentals=0,
        bytes_accessed=4 * (m_pad * k_pad + k_pad * n_pad + m_pad * n_pad),
    )
    out = pl.pallas_call(
        _matmul_bias_kernel,
        out_shape=jax.ShapeDtypeStruct((m_pad, n_pad), x.dtype),
        grid_spec=pltpu.PrefetchScalarGridSpec(
            num_scalar_prefetch=0,
            grid=grid,
            in_specs=[
                pl.BlockSpec((tm, tk), lambda i, j, k: (i, k)),
                pl.BlockSpec((tk, tn), lambda i, j, k: (k, j)),
                pl.BlockSpec((1, tn), lambda i, j, k: (0, j)),
            ],
            out_specs=pl.BlockSpec((tm, tn), lambda i, j, k: (i, j)),
            scratch_shapes=[pltpu.VMEM((tm, tn), jnp.float32)],
        ),
        compiler_params=pltpu.CompilerParams(
            dimension_semantics=("parallel", "parallel", "arbitrary"),
            vmem_limit_bytes=_VMEM_LIMIT,
        ),
        cost_estimate=cost,
    )(x, wt, b2)
    return out[:M, :N]


# ---------------------------------------------------------------------------
# Network (forward only): output = x @ W.T + b
# ---------------------------------------------------------------------------
def network_forward(x, weight, bias):
    if weight.shape[0] == 1:
        return _linear_n1(x, weight, bias)
    return _linear_general(x, weight, bias)


def init_network_params(key, input_dim, output_dim=1):
    """Deterministic init mimicking nn.Linear default (U[-1/sqrt(in), 1/sqrt(in)])."""
    kw, kb = jax.random.split(key)
    bound = 1.0 / jnp.sqrt(jnp.float32(input_dim))
    weight = jax.random.uniform(
        kw, (output_dim, input_dim), jnp.float32, -bound, bound
    )
    bias = jax.random.uniform(kb, (output_dim,), jnp.float32, -bound, bound)
    return weight, bias


if __name__ == "__main__":
    batch = 8
    input_dim = 32
    output_dim = 1

    key = jax.random.PRNGKey(0)
    k_x, k_p1, k_p2 = jax.random.split(key, 3)

    x = jax.random.normal(k_x, (batch, input_dim), dtype=jnp.float32)

    # Shipped case: output_dim = 1  (VPU + SMEM-bias path).
    weight, bias = init_network_params(k_p1, input_dim, output_dim)
    out = jax.block_until_ready(network_forward(x, weight, bias))
    ref = x @ weight.T + bias
    assert out.shape == (batch, output_dim)
    assert jnp.allclose(out, ref, atol=1e-4, rtol=1e-4)

    # Also exercise the general tiled MXU path (output_dim > 1).
    weight2, bias2 = init_network_params(k_p2, input_dim, 4)
    out2 = jax.block_until_ready(network_forward(x, weight2, bias2))
    ref2 = x @ weight2.T + bias2
    assert out2.shape == (batch, 4)
    assert jnp.allclose(out2, ref2, atol=1e-4, rtol=1e-4)

    print("KERNEL_OK")
</pallas_src>

<mosaic_0001>
module attributes {stable_mosaic.version = 11 : i64} {
  func.func @_linear_n1_kernel(%arg0: i32, %arg1: memref<8x32xf32, #tpu.memory_space<vmem>>, %arg2: memref<1x32xf32, #tpu.memory_space<vmem>>, %arg3: memref<1xf32, #tpu.memory_space<smem>>, %arg4: memref<8x128xf32, #tpu.memory_space<vmem>>) attributes {dimension_semantics = [#tpu.dimension_semantics<parallel>], iteration_bounds = array<i64: 1>, scalar_prefetch = 0 : i64, scratch_operands = 0 : i64, tpu.core_type = #tpu.core_type<tc>, window_params = [{transform_indices = @transform_0, window_bounds = array<i64: 8, 32>}, {pipeline_mode = #tpu.pipeline_mode<synchronous>, transform_indices = @transform_1, window_bounds = array<i64: 1, 32>}, {transform_indices = @transform_2, window_bounds = array<i64: 1>}, {transform_indices = @transform_3, window_bounds = array<i64: 8, 128>}]} {
    %c0 = arith.constant 0 : index
    %c0_0 = arith.constant 0 : index
    %0 = vector.load %arg1[%c0, %c0_0] : memref<8x32xf32, #tpu.memory_space<vmem>>, vector<8x32xf32>
    %c0_1 = arith.constant 0 : index
    %c0_2 = arith.constant 0 : index
    %1 = vector.load %arg2[%c0_1, %c0_2] : memref<1x32xf32, #tpu.memory_space<vmem>>, vector<1x32xf32>
    %2 = vector.broadcast %1 : vector<1x32xf32> to vector<8x32xf32>
    %3 = arith.mulf %0, %2 : vector<8x32xf32>
    %cst = arith.constant dense<0.000000e+00> : vector<8xf32>
    %4 = vector.multi_reduction <add>, %3, %cst [1] : vector<8x32xf32> to vector<8xf32>
    %5 = vector.shape_cast %4 : vector<8xf32> to vector<8x1xf32>
    %c0_3 = arith.constant 0 : index
    %6 = memref.load %arg3[%c0_3] : memref<1xf32, #tpu.memory_space<smem>>
    %7 = vector.broadcast %6 : f32 to vector<8x1xf32>
    %8 = arith.addf %5, %7 : vector<8x1xf32>
    %9 = vector.shape_cast %8 : vector<8x1xf32> to vector<8x1xf32>
    %10 = vector.broadcast %9 : vector<8x1xf32> to vector<8x128xf32>
    %c0_4 = arith.constant 0 : index
    %c0_5 = arith.constant 0 : index
    %11 = vector.load %arg4[%c0_4, %c0_5] : memref<8x128xf32, #tpu.memory_space<vmem>>, vector<8x128xf32>
    tpu.vector_store %arg4[%c0_4, %c0_5], %10 {strides = array<i32>} : memref<8x128xf32, #tpu.memory_space<vmem>>, vector<8x128xf32>,
    return
  }
  func.func @transform_0(%arg0: i32) -> (i32, i32) {
    %c0_i32 = arith.constant 0 : i32
    %c0_i32_0 = arith.constant 0 : i32
    return %arg0, %c0_i32 : i32, i32
  }
  func.func @transform_1(%arg0: i32) -> (i32, i32) {
    %c0_i32 = arith.constant 0 : i32
    %c0_i32_0 = arith.constant 0 : i32
    %c0_i32_1 = arith.constant 0 : i32
    return %c0_i32, %c0_i32_0 : i32, i32
  }
  func.func @transform_2(%arg0: i32) -> i32 {
    %c0_i32 = arith.constant 0 : i32
    %c0_i32_0 = arith.constant 0 : i32
    return %c0_i32 : i32
  }
  func.func @transform_3(%arg0: i32) -> (i32, i32) {
    %c0_i32 = arith.constant 0 : i32
    %c0_i32_0 = arith.constant 0 : i32
    return %arg0, %c0_i32 : i32, i32
  }
}

</mosaic_0001>

<llo_original>
// kernel: tpu_custom_call.1
$region0: #{tpu_custom_call.1}
  #allocation0 [shape = 'u32[]', space=smem, size = 0x4, offset = 0x4, fixed_abs, tag = 'smem constant byte address 0x4 - core index']
  #allocation1 [shape = 'u32[72,128]{1,0:T(1,128)}', space=vmem, size = 0x9000, scoped, tag = 'internal scratch']
  #allocation2 [shape = 'f32[1]{0:T(128)S(6)}', space=smem, size = 0x200, scoped, tag = 'scoped memory for tpu_custom_call.1']
  %s0 = inlined_call_operand.hbm [shape: f32[8,32], index: 0, kind: input, shape index: {}]
  %s1 = inlined_call_operand.vmem [shape: f32[1,32], index: 1, kind: input, shape index: {}]
  %s2 = inlined_call_operand.<no memory space> [shape: f32[1], index: 2, kind: input, shape index: {}]
  %s3 = inlined_call_operand.hbm [shape: f32[8,128], index: 3, kind: output, shape index: {}]
  %s4 = sld [smem:[#allocation0]]
  $region26: #{tpu_custom_call.1} parent=0
    _
  %s6 = ssub.s32 1, %s4
  %s7 = scalar_select 0, %s6, %s4
  %8 = sst [smem:[#allocation2]] %s2
  $region1: #{tpu_custom_call.1} parent=0
    #allocation3 [shape = 'u8[4096]{0}', space=vmem, size = 0x1000, scoped, tag = 'input window, operand 0, single buffered']
    #allocation4 [shape = 's32[1]{0}', space=sflag, size = 0x4, scoped, tag = 'scoped memory for tpu_custom_call.1']
    #allocation5 [shape = 's32[1]{0}', space=sflag, size = 0x4, scoped, tag = 'scoped memory for tpu_custom_call.1']
    #allocation6 [shape = 'u8[4096]{0}', space=vmem, size = 0x1000, scoped, tag = 'output window, operand 0, single buffered']
    %9 = vsyncpa [#allocation4], 0
    %10 = vsyncpa [#allocation5], 0
    // Predicated region
    $region2: #{tpu_custom_call.1} parent=1 // pred_check
      _
    $region3: #{tpu_custom_call.1} parent=1 // pred_check_branch
      %12 = sbr.rel (0) target = $region5
    $region4: #{tpu_custom_call.1} parent=1 // pred_region
      %14 = vsyncadd [#allocation4], 0
      %s16 = sshll.u32 %s0, 4
      %s17 = int_to_ptr.hbm [resolvable:$true] %s16
      %s18 = sshll.u32 [#allocation3], 4
      %s19 = int_to_ptr.vmem [resolvable:$true] %s18
      %21 = dma.hbm_to_vmem [thread:$0]  %s17, 128, %s19, [#allocation4]
    $region5: #{tpu_custom_call.1} parent=1 // pred_fallthru
      _
    // Predicated region
    $region6: #{tpu_custom_call.1} parent=1 // pred_check
      _
    $region7: #{tpu_custom_call.1} parent=1 // pred_check_branch
      %23 = sbr.rel (0) target = $region9
    $region8: #{tpu_custom_call.1} parent=1 // pred_region
      _
    $region9: #{tpu_custom_call.1} parent=1 // pred_fallthru
      _
    // Predicated region
    $region10: #{tpu_custom_call.1} parent=1 // pred_check
      _
    $region11: #{tpu_custom_call.1} parent=1 // pred_check_branch
      %25 = sbr.rel (0) target = $region13
    $region12: #{tpu_custom_call.1} parent=1 // pred_region
      _
    $region13: #{tpu_custom_call.1} parent=1 // pred_fallthru
      _
    // Predicated region
    $region14: #{tpu_custom_call.1} parent=1 // pred_check
      _
    $region15: #{tpu_custom_call.1} parent=1 // pred_check_branch
      %27 = sbr.rel (0) target = $region17
    $region16: #{tpu_custom_call.1} parent=1 // pred_region
      %29 = dma.done [#allocation4], 128
    $region17: #{tpu_custom_call.1} parent=1 // pred_fallthru
      _
    %v30 = vld [vmem:[#allocation3] sm:$0xff]
    %v31 = vld [vmem:[%s1] sm:$0x1]
    %v33 = vperm.slane %v31, 0
    %v35 = vmul.f32 %v30, %v33
    %vm36 = vcmask 261120
    %v37 = vsel %vm36, %v35, 0.0
    %38 = vadd.xlane.f32.xlu0 %v37
    %v39 = vpop.xlane.xlu0 %38
    %s40 = sld [smem:[#allocation2]]
    %v41 = vstv %s40
    %v42 = vadd.f32 %v39, %v41
    %43 = vst [vmem:[#allocation6] sm:$0xff] %v42
    // Predicated region
    $region18: #{tpu_custom_call.1} parent=1 // pred_check
      _
    $region19: #{tpu_custom_call.1} parent=1 // pred_check_branch
      %45 = sbr.rel (0) target = $region21
    $region20: #{tpu_custom_call.1} parent=1 // pred_region
      %47 = vsyncadd [#allocation5], 0
      %s49 = sshll.u32 [#allocation6], 4
      %s50 = int_to_ptr.vmem [resolvable:$true] %s49
      %s51 = sshll.u32 %s3, 4
      %s52 = int_to_ptr.hbm [resolvable:$true] %s51
      %54 = dma.vmem_to_hbm [thread:$0]  %s50, 128, %s52, [#allocation5]
    $region21: #{tpu_custom_call.1} parent=1 // pred_fallthru
      _
    // Predicated region
    $region22: #{tpu_custom_call.1} parent=1 // pred_check
      _
    $region23: #{tpu_custom_call.1} parent=1 // pred_check_branch
      %56 = sbr.rel (0) target = $region25
    $region24: #{tpu_custom_call.1} parent=1 // pred_region
      %58 = dma.done [#allocation5], 128
    $region25: #{tpu_custom_call.1} parent=1 // pred_fallthru
      _
    %59 = vsyncpa [#allocation4], 1
    %60 = vsyncpa [#allocation5], 1

</llo_original>
